<compile_context>
chip_gen: v6e
topology: v6e:2x2x1
jax: 0.10.0
libtpu: 0.0.40
codegen_flags: <defaults>
</compile_context>

<pallas_src>
import jax
import jax.numpy as jnp
from jax import lax
from jax.experimental import pallas as pl
from jax.experimental.pallas import tpu as pltpu


_MIN_ROWS = 32          # covers min sublane tiles: f32=8, bf16=16, int8/fp8=32
_LANE = 128             # VMEM lane width


def _round_up(x, m):
    return ((x + m - 1) // m) * m


def _chip_budgets():
    """Returns (stream_budget_bytes, vmem_cap_bytes, force_two_steps).

    stream_budget covers BOTH double-buffered streamed operands (x and out).
    """
    try:
        kind = jax.devices()[0].device_kind.lower()
    except Exception:  # pragma: no cover - defensive
        kind = ""
    if "v5" in kind:
        # 128 MiB physical VMEM; default scoped limit (16 MiB) must be raised.
        return 48 << 20, 96 << 20, False
    if "v6" in kind:
        # 128 MiB physical VMEM, 1.4 TB/s HBM: go for the biggest tiles.
        return 64 << 20, 96 << 20, False
    if "v7" in kind or "7x" in kind:
        # Only 64 MiB VMEM per TensorCore: stay <= 48 MiB scoped, and make sure
        # the parallel M axis has >= 2 grid steps so both TCs get work.
        return 32 << 20, 48 << 20, True
    # Unknown / future chip: conservative settings that fit a 64 MiB VMEM.
    return 16 << 20, 48 << 20, True


def _choose_tile_m(m, k, out_dim, itemsize, stream_budget, force_two_steps):
    """Largest TM whose double-buffered (x + out) tiles fit the stream budget."""
    if m <= _MIN_ROWS:
        return m  # full-extent block is always a legal block shape

    k_pad = _round_up(k, _LANE)
    n_pad = _round_up(out_dim, _LANE)
    # Bytes of VMEM per row of M, across double-buffered x and out tiles.
    row_bytes = 2 * (k_pad + n_pad) * itemsize
    tm = stream_budget // max(1, row_bytes)

    if force_two_steps:
        # Cap so the grid has at least 2 iterations (both v7x TCs engage).
        tm = min(tm, _round_up(pl.cdiv(m, 2), _MIN_ROWS))

    tm = min(tm, m)
    if tm < m:
        if tm >= _MIN_ROWS:
            tm = (tm // _MIN_ROWS) * _MIN_ROWS
        else:
            # Extreme-K fallback: keep the second-to-last dim a multiple of 8.
            tm = max(8, (tm // 8) * 8)
    return tm


def _vmem_limit_bytes(tm, k, out_dim, x_itemsize, cap):
    """Scoped-VMEM limit derived from the actual tile sizes (+ headroom)."""
    k_pad = _round_up(k, _LANE)
    n_pad = _round_up(out_dim, _LANE)
    x_tile = tm * k_pad * x_itemsize
    o_tile = tm * n_pad * x_itemsize
    # (3, K) weight pads to (8, k_pad) f32-equivalent; bias (1, N) pads to (8, 128).
    w_block = 8 * k_pad * 4
    b_block = 8 * _LANE * 4
    need = 2 * (x_tile + o_tile) + 2 * (w_block + b_block)
    limit = need + (8 << 20)          # margin for Mosaic internal scratch
    limit = max(limit, 32 << 20)      # never go below a comfortable floor
    return int(min(cap, limit))


def _linear_kernel(x_ref, w_ref, b_ref, o_ref):
    # x_ref: (TM, K); w_ref: (N, K) [PyTorch layout]; b_ref: (1, N) f32; o_ref: (TM, N)
    acc = lax.dot_general(
        x_ref[...],
        w_ref[...],
        dimension_numbers=(((1,), (1,)), ((), ())),
        preferred_element_type=jnp.float32,
    )
    o_ref[...] = (acc + b_ref[...]).astype(o_ref.dtype)


def sentiment_detection_layer(claim_embed, weight, bias):
    """Equivalent of nn.Linear(input_dim, 3) forward.

    claim_embed: (..., input_dim)
    weight:      (3, input_dim)   -- PyTorch Linear convention
    bias:        (3,)
    returns:     (..., 3)
    """
    *lead, input_dim = claim_embed.shape
    out_dim = weight.shape[0]
    m = 1
    for d in lead:
        m *= d

    if m == 0:  # degenerate empty-batch case
        return jnp.zeros((*lead, out_dim), dtype=claim_embed.dtype)

    x2d = claim_embed.reshape(m, input_dim)
    b2d = bias.astype(jnp.float32).reshape(1, out_dim)

    stream_budget, vmem_cap, force_two_steps = _chip_budgets()
    itemsize = x2d.dtype.itemsize
    tm = _choose_tile_m(m, input_dim, out_dim, itemsize, stream_budget,
                        force_two_steps)
    grid = (pl.cdiv(m, tm),)
    vmem_limit = _vmem_limit_bytes(tm, input_dim, out_dim, itemsize, vmem_cap)

    bytes_accessed = (
        x2d.size * x2d.dtype.itemsize
        + weight.size * weight.dtype.itemsize
        + b2d.size * b2d.dtype.itemsize
        + m * out_dim * x2d.dtype.itemsize
    )
    cost = pl.CostEstimate(
        flops=2 * m * input_dim * out_dim,
        transcendentals=0,
        bytes_accessed=int(bytes_accessed),
    )

    out2d = pl.pallas_call(
        _linear_kernel,
        out_shape=jax.ShapeDtypeStruct((m, out_dim), claim_embed.dtype),
        grid_spec=pltpu.PrefetchScalarGridSpec(
            num_scalar_prefetch=0,
            grid=grid,
            in_specs=[
                # Activations: streamed over M (double-buffered by Pallas).
                pl.BlockSpec((tm, input_dim), lambda i: (i, 0)),
                # Weight (3, K): constant block, stays VMEM-resident (~KiB).
                pl.BlockSpec((out_dim, input_dim), lambda i: (0, 0)),
                # Bias (1, 3) f32: constant block.
                pl.BlockSpec((1, out_dim), lambda i: (0, 0)),
            ],
            out_specs=pl.BlockSpec((tm, out_dim), lambda i: (i, 0)),
        ),
        compiler_params=pltpu.CompilerParams(
            dimension_semantics=("parallel",),
            vmem_limit_bytes=vmem_limit,
        ),
        cost_estimate=cost,
    )(x2d, weight, b2d)

    return out2d.reshape(*lead, out_dim)


if __name__ == "__main__":
    key = jax.random.PRNGKey(0)
    k_x, k_w, k_b = jax.random.split(key, 3)

    batch, seq, input_dim = 2, 8, 32  # claim_embed: (batch, seq, hidden)
    out_dim = 3

    claim_embed = jax.random.normal(k_x, (batch, seq, input_dim), dtype=jnp.float32)

    # Deterministic parameter init matching nn.Linear's uniform(-1/sqrt(K), 1/sqrt(K)).
    bound = 1.0 / (input_dim ** 0.5)
    weight = jax.random.uniform(k_w, (out_dim, input_dim), jnp.float32, -bound, bound)
    bias = jax.random.uniform(k_b, (out_dim,), jnp.float32, -bound, bound)

    stance_embed = sentiment_detection_layer(claim_embed, weight, bias)
    jax.block_until_ready(stance_embed)

    # Cross-check against plain JAX reference.
    ref = claim_embed @ weight.T + bias
    assert stance_embed.shape == (batch, seq, out_dim)
    assert jnp.allclose(stance_embed, ref, atol=1e-5, rtol=1e-5)

    print("KERNEL_OK")
</pallas_src>

<mosaic_0001>
module attributes {stable_mosaic.version = 11 : i64} {
  func.func @_linear_kernel(%arg0: i32, %arg1: memref<16x32xf32, #tpu.memory_space<vmem>>, %arg2: memref<3x32xf32, #tpu.memory_space<vmem>>, %arg3: memref<1x3xf32, #tpu.memory_space<vmem>>, %arg4: memref<16x3xf32, #tpu.memory_space<vmem>>) attributes {dimension_semantics = [#tpu.dimension_semantics<parallel>], iteration_bounds = array<i64: 1>, scalar_prefetch = 0 : i64, scratch_operands = 0 : i64, tpu.core_type = #tpu.core_type<tc>, window_params = [{transform_indices = @transform_0, window_bounds = array<i64: 16, 32>}, {pipeline_mode = #tpu.pipeline_mode<synchronous>, transform_indices = @transform_1, window_bounds = array<i64: 3, 32>}, {pipeline_mode = #tpu.pipeline_mode<synchronous>, transform_indices = @transform_2, window_bounds = array<i64: 1, 3>}, {transform_indices = @transform_3, window_bounds = array<i64: 16, 3>}]} {
    %c0 = arith.constant 0 : index
    %c0_0 = arith.constant 0 : index
    %0 = vector.load %arg1[%c0, %c0_0] : memref<16x32xf32, #tpu.memory_space<vmem>>, vector<16x32xf32>
    %c0_1 = arith.constant 0 : index
    %c0_2 = arith.constant 0 : index
    %1 = vector.load %arg2[%c0_1, %c0_2] : memref<3x32xf32, #tpu.memory_space<vmem>>, vector<3x32xf32>
    %cst = arith.constant dense<0.000000e+00> : vector<16x3xf32>
    %2 = tpu.matmul %0, %1, %cst {dimension_numbers = #tpu.dot_dimension_numbers<[1], [1], [0], [0], [0, 0, 1, 0], [], []>} : vector<16x32xf32>, vector<3x32xf32>, vector<16x3xf32> -> vector<16x3xf32>
    %c0_3 = arith.constant 0 : index
    %c0_4 = arith.constant 0 : index
    %3 = vector.load %arg3[%c0_3, %c0_4] : memref<1x3xf32, #tpu.memory_space<vmem>>, vector<1x3xf32>
    %4 = vector.broadcast %3 : vector<1x3xf32> to vector<16x3xf32>
    %5 = arith.addf %2, %4 : vector<16x3xf32>
    %c0_5 = arith.constant 0 : index
    %c0_6 = arith.constant 0 : index
    %6 = vector.load %arg4[%c0_5, %c0_6] : memref<16x3xf32, #tpu.memory_space<vmem>>, vector<16x3xf32>
    tpu.vector_store %arg4[%c0_5, %c0_6], %5 {strides = array<i32>} : memref<16x3xf32, #tpu.memory_space<vmem>>, vector<16x3xf32>,
    return
  }
  func.func @transform_0(%arg0: i32) -> (i32, i32) {
    %c0_i32 = arith.constant 0 : i32
    %c0_i32_0 = arith.constant 0 : i32
    return %arg0, %c0_i32 : i32, i32
  }
  func.func @transform_1(%arg0: i32) -> (i32, i32) {
    %c0_i32 = arith.constant 0 : i32
    %c0_i32_0 = arith.constant 0 : i32
    %c0_i32_1 = arith.constant 0 : i32
    return %c0_i32, %c0_i32_0 : i32, i32
  }
  func.func @transform_2(%arg0: i32) -> (i32, i32) {
    %c0_i32 = arith.constant 0 : i32
    %c0_i32_0 = arith.constant 0 : i32
    %c0_i32_1 = arith.constant 0 : i32
    return %c0_i32, %c0_i32_0 : i32, i32
  }
  func.func @transform_3(%arg0: i32) -> (i32, i32) {
    %c0_i32 = arith.constant 0 : i32
    %c0_i32_0 = arith.constant 0 : i32
    return %arg0, %c0_i32 : i32, i32
  }
}

</mosaic_0001>

<llo_original>
// kernel: tpu_custom_call.1
$region0: #{tpu_custom_call.1}
  #allocation0 [shape = 'u32[]', space=smem, size = 0x4, offset = 0x4, fixed_abs, tag = 'smem constant byte address 0x4 - core index']
  #allocation1 [shape = 'u32[144,128]{1,0:T(1,128)}', space=vmem, size = 0x12000, scoped, tag = 'internal scratch']
  %s0 = inlined_call_operand.hbm [shape: f32[16,32], index: 0, kind: input, shape index: {}]
  %s1 = inlined_call_operand.hbm [shape: f32[3,32], index: 1, kind: input, shape index: {}]
  %s2 = inlined_call_operand.vmem [shape: f32[1,3], index: 2, kind: input, shape index: {}]
  %s3 = inlined_call_operand.vmem [shape: f32[16,3], index: 3, kind: output, shape index: {}]
  %s4 = sld [smem:[#allocation0]]
  $region30: #{tpu_custom_call.1} parent=0
    _
  %s6 = ssub.s32 1, %s4
  %s7 = scalar_select 0, %s6, %s4
  $region1: #{tpu_custom_call.1} parent=0
    #allocation2 [shape = 'u8[8192]{0}', space=vmem, size = 0x2000, scoped, tag = 'input window, operand 0, single buffered']
    #allocation3 [shape = 's32[1]{0}', space=sflag, size = 0x4, scoped, tag = 'scoped memory for tpu_custom_call.1']
    #allocation4 [shape = 'u8[2048]{0}', space=vmem, size = 0x800, scoped, tag = 'input window, operand 1, single buffered']
    #allocation5 [shape = 's32[1]{0}', space=sflag, size = 0x4, scoped, tag = 'scoped memory for tpu_custom_call.1']
    %8 = vsyncpa [#allocation3], 0
    %9 = vsyncpa [#allocation5], 0
    // Predicated region
    $region2: #{tpu_custom_call.1} parent=1 // pred_check
      _
    $region3: #{tpu_custom_call.1} parent=1 // pred_check_branch
      %11 = sbr.rel (0) target = $region5
    $region4: #{tpu_custom_call.1} parent=1 // pred_region
      %s13 = ssub.s32 256, 256
      %14 = vsyncadd [#allocation3], %s13
      %s15 = sshll.u32 [#allocation2], 4
      %s16 = int_to_ptr.vmem [resolvable:$true] %s15
      %21 = dma.hbm_to_vmem [thread:$0]  %s0, 256, %s16, [#allocation3], 128, 128, 8
    $region5: #{tpu_custom_call.1} parent=1 // pred_fallthru
      _
    // Predicated region
    $region6: #{tpu_custom_call.1} parent=1 // pred_check
      _
    $region7: #{tpu_custom_call.1} parent=1 // pred_check_branch
      %23 = sbr.rel (0) target = $region9
    $region8: #{tpu_custom_call.1} parent=1 // pred_region
      %s25 = ssub.s32 64, 64
      %26 = vsyncadd [#allocation5], %s25
      %s28 = sshll.u32 [#allocation4], 4
      %s29 = int_to_ptr.vmem [resolvable:$true] %s28
      %31 = dma.hbm_to_vmem [thread:$0]  %s1, 64, %s29, [#allocation5]
    $region9: #{tpu_custom_call.1} parent=1 // pred_fallthru
      _
    // Predicated region
    $region10: #{tpu_custom_call.1} parent=1 // pred_check
      _
    $region11: #{tpu_custom_call.1} parent=1 // pred_check_branch
      %33 = sbr.rel (0) target = $region13
    $region12: #{tpu_custom_call.1} parent=1 // pred_region
      _
    $region13: #{tpu_custom_call.1} parent=1 // pred_fallthru
      _
    // Predicated region
    $region14: #{tpu_custom_call.1} parent=1 // pred_check
      _
    $region15: #{tpu_custom_call.1} parent=1 // pred_check_branch
      %35 = sbr.rel (0) target = $region17
    $region16: #{tpu_custom_call.1} parent=1 // pred_region
      %36 = dma.done [#allocation3], 256
    $region17: #{tpu_custom_call.1} parent=1 // pred_fallthru
      _
    // Predicated region
    $region18: #{tpu_custom_call.1} parent=1 // pred_check
      _
    $region19: #{tpu_custom_call.1} parent=1 // pred_check_branch
      %38 = sbr.rel (0) target = $region21
    $region20: #{tpu_custom_call.1} parent=1 // pred_region
      %39 = dma.done [#allocation5], 64
    $region21: #{tpu_custom_call.1} parent=1 // pred_fallthru
      _
    %v40 = vld [vmem:[#allocation2] sm:$0xff]
    %v41 = vld [vmem:[#allocation2 + $0x8] sm:$0xff]
    %v42 = vld [vmem:[#allocation4] sm:$0x7]
    %v43 = vld [vmem:[%s2] sm:$0x1]
    %v45 = vlaneseq
    %v46 = vshrl.u32 %v45, 7
    %v47 = vsub.s32 0, %v46
    %v48 = vrot.slane %v43, %v47
    %vm50 = vcmask 261120
    %v52 = vsel %vm50, %v40, 0
    %v55 = vsel %vm50, %v41, 0
    %v58 = vsel %vm50, %v42, 0
    %60 = vmatprep.subr.mxu0 0.0
    %61 = vmatpush1.xpose.msra.mxu0 0.0
    %62 = vmatprep.subr.mxu0 0.0
    %63 = vmatpush1.xpose.msra.mxu0 0.0
    %64 = vmatprep.subr.mxu0 0.0
    %65 = vmatpush1.xpose.msra.mxu0 0.0
    %66 = vmatprep.subr.mxu0 0.0
    %67 = vmatpush1.xpose.msra.mxu0 0.0
    %68 = vmatprep.subr.mxu0 0.0
    %69 = vmatpush1.xpose.msra.mxu0 0.0
    %70 = vmatprep.subr.mxu0 0.0
    %71 = vmatpush1.xpose.msra.mxu0 0.0
    %72 = vmatprep.subr.mxu0 0.0
    %73 = vmatpush1.xpose.msra.mxu0 0.0
    %74 = vmatprep.subr.mxu0 0.0
    %75 = vmatpush1.xpose.msra.mxu0 0.0
    %76 = vmatprep.subr.mxu0 0.0
    %77 = vmatpush1.xpose.msra.mxu0 0.0
    %78 = vmatprep.subr.mxu0 0.0
    %79 = vmatpush1.xpose.msra.mxu0 0.0
    %80 = vmatprep.subr.mxu0 0.0
    %81 = vmatpush1.xpose.msra.mxu0 0.0
    %82 = vmatprep.subr.mxu0 0.0
    %83 = vmatpush1.xpose.msra.mxu0 0.0
    %84 = vmatprep.subr.mxu0 0.0
    %85 = vmatpush1.xpose.msra.mxu0 0.0
    %86 = vmatprep.subr.mxu0 0.0
    %87 = vmatpush1.xpose.msra.mxu0 0.0
    %88 = vmatprep.subr.mxu0 0.0
    %89 = vmatpush1.xpose.msra.mxu0 0.0
    %90 = vmatprep.subr.mxu0 0.0
    %91 = vmatpush1.xpose.msra.mxu0 %v58
    %92 = vmatprep.subr.mxu0 0.0
    %93 = vmatpush2.xpose.msra.mxu0 0.0
    %94 = vmatprep.subr.mxu0 0.0
    %95 = vmatpush2.xpose.msra.mxu0 0.0
    %96 = vmatprep.subr.mxu0 0.0
    %97 = vmatpush2.xpose.msra.mxu0 0.0
    %98 = vmatprep.subr.mxu0 0.0
    %99 = vmatpush2.xpose.msra.mxu0 0.0
    %100 = vmatprep.subr.mxu0 0.0
    %101 = vmatpush2.xpose.msra.mxu0 0.0
    %102 = vmatprep.subr.mxu0 0.0
    %103 = vmatpush2.xpose.msra.mxu0 0.0
    %104 = vmatprep.subr.mxu0 0.0
    %105 = vmatpush2.xpose.msra.mxu0 0.0
    %106 = vmatprep.subr.mxu0 0.0
    %107 = vmatpush2.xpose.msra.mxu0 0.0
    %108 = vmatprep.subr.mxu0 0.0
    %109 = vmatpush2.xpose.msra.mxu0 0.0
    %110 = vmatprep.subr.mxu0 0.0
    %111 = vmatpush2.xpose.msra.mxu0 0.0
    %112 = vmatprep.subr.mxu0 0.0
    %113 = vmatpush2.xpose.msra.mxu0 0.0
    %114 = vmatprep.subr.mxu0 0.0
    %115 = vmatpush2.xpose.msra.mxu0 0.0
    %116 = vmatprep.subr.mxu0 0.0
    %117 = vmatpush2.xpose.msra.mxu0 0.0
    %118 = vmatprep.subr.mxu0 0.0
    %119 = vmatpush2.xpose.msra.mxu0 0.0
    %120 = vmatprep.subr.mxu0 0.0
    %121 = vmatpush2.xpose.msra.mxu0 0.0
    %122 = vmatprep.subr.mxu0 0.0
    %123 = vmatpush2.xpose.msra.mxu0 0.0
    %124 = vmatprep.mubr.f32.mxu0 0.0
    %125 = vmatmul.mubr.f32.gmra.mxu0 %v52
    %v126 = vpop.f32.mrf.mxu0
    %v127 = vadd.f32 %v48, %v126
    %v128 = vpop.f32.mrf.mxu0
    %129 = vmatprep.mubr.f32.mxu0 0.0
    %130 = vmatmul.mubr.f32.gmra.mxu0 %v55
    %v131 = vpop.f32.mrf.mxu0
    %v132 = vadd.f32 %v48, %v131
    %v133 = vpop.f32.mrf.mxu0
    %134 = vdwg.mxu0
    %vm135 = vcmask 23552
    %136 = vst.msk [vmem:[%s3] sm:$0xff] %vm135, %v127
    %137 = vst.msk [vmem:[%s3 + $0x8] sm:$0xff] %vm135, %v132
    // Predicated region
    $region22: #{tpu_custom_call.1} parent=1 // pred_check
      _
    $region23: #{tpu_custom_call.1} parent=1 // pred_check_branch
      %139 = sbr.rel (0) target = $region25
    $region24: #{tpu_custom_call.1} parent=1 // pred_region
      _
    $region25: #{tpu_custom_call.1} parent=1 // pred_fallthru
      _
    // Predicated region
    $region26: #{tpu_custom_call.1} parent=1 // pred_check
      _
    $region27: #{tpu_custom_call.1} parent=1 // pred_check_branch
      %141 = sbr.rel (0) target = $region29
    $region28: #{tpu_custom_call.1} parent=1 // pred_region
      _
    $region29: #{tpu_custom_call.1} parent=1 // pred_fallthru
      _
    %142 = vsyncpa [#allocation3], 1
    %143 = vsyncpa [#allocation5], 1

</llo_original>
